<compile_context>
chip_gen: v7x
topology: tpu7x:2x2x1
jax: 0.10.0
libtpu: 0.0.40
codegen_flags: <defaults>
</compile_context>

<pallas_src>
import jax
import jax.numpy as jnp
from jax.experimental import pallas as pl
from jax.experimental.pallas import tpu as pltpu


def fitfunc_kernel(params_ref, x_ref, o_ref):
    # params_ref: SMEM, shape (3,) -> [A, B, C]
    A = params_ref[0]
    B = params_ref[1]
    C = params_ref[2]
    # Elementwise hot path: A * cos(B + x) + C  (VPU / EUP work, mem-bound)
    o_ref[...] = A * jnp.cos(B + x_ref[...]) + C


def _round_up(a, b):
    return ((a + b - 1) // b) * b


def fit_func(x, A, B, C, *, block_rows=512, block_cols=1024):
    """Pallas implementation of FitFunc.forward for arbitrary-shaped x.

    x: float32 array of any shape (elementwise op).
    A, B, C: scalar float32 parameters.
    """
    orig_shape = x.shape
    params = jnp.stack(
        [jnp.asarray(A, jnp.float32),
         jnp.asarray(B, jnp.float32),
         jnp.asarray(C, jnp.float32)]
    )

    # Flatten to a lane-dense 2D slab: (rows, block_cols).
    flat = x.reshape(-1)
    n = flat.shape[0]
    cols = block_cols                       # lane-dense, multiple of 128
    rows = pl.cdiv(n, cols)

    # Row blocking: big blocks for large inputs, minimal (multiple-of-8)
    # padding for small ones. 512x1024 f32 = 2 MiB per block -> in + out,
    # double-buffered, ~8 MiB of VMEM: safe on v5e/v6e/v7x scoped defaults.
    if rows >= block_rows:
        br = block_rows
    else:
        br = _round_up(max(rows, 1), 8)
    grid_rows = pl.cdiv(rows, br)
    rows_padded = grid_rows * br

    pad = rows_padded * cols - n
    if pad:
        flat = jnp.concatenate([flat, jnp.zeros((pad,), dtype=flat.dtype)])
    x2 = flat.reshape(rows_padded, cols)

    out2 = pl.pallas_call(
        fitfunc_kernel,
        out_shape=jax.ShapeDtypeStruct((rows_padded, cols), x.dtype),
        grid=(grid_rows,),
        in_specs=[
            pl.BlockSpec(memory_space=pltpu.SMEM),        # params (whole, SMEM)
            pl.BlockSpec((br, cols), lambda i: (i, 0)),   # x tile
        ],
        out_specs=pl.BlockSpec((br, cols), lambda i: (i, 0)),
        compiler_params=pltpu.CompilerParams(
            dimension_semantics=("parallel",)),
    )(params, x2)

    # Trim padding and restore the caller's shape.
    return out2.reshape(-1)[:n].reshape(orig_shape)


if __name__ == "__main__":
    key = jax.random.PRNGKey(0)
    k_diff, k_x1, k_x2 = jax.random.split(key, 3)

    # Deterministic synthetic stand-in for d['first_diff'] used in __init__.
    first_diff = jax.random.normal(k_diff, (64,), dtype=jnp.float32) * 0.5 + 1.2

    # Parameter initialization exactly as the module's __init__ specifies.
    A = first_diff.max() - first_diff.min()
    B = jnp.float32(1.0)
    C = first_diff.mean()

    # Small inputs consistent with an elementwise forward:
    #   (16, 128)  -> nicely aligned
    #   (23, 77)   -> exercises the pad/trim path (no rows silently dropped)
    x1 = jax.random.normal(k_x1, (16, 128), dtype=jnp.float32)
    x2 = jax.random.normal(k_x2, (23, 77), dtype=jnp.float32)

    for x in (x1, x2):
        out = jax.block_until_ready(fit_func(x, A, B, C))
        ref = A * jnp.cos(B + x) + C
        assert out.shape == x.shape and out.dtype == x.dtype
        assert jnp.allclose(out, ref, atol=1e-5, rtol=1e-5), "mismatch vs reference"

    print("KERNEL_OK")
</pallas_src>

<mosaic_0001>
module attributes {stable_mosaic.version = 11 : i64} {
  func.func @fitfunc_kernel(%arg0: i32, %arg1: memref<3xf32, #tpu.memory_space<smem>>, %arg2: memref<8x1024xf32, #tpu.memory_space<vmem>>, %arg3: memref<8x1024xf32, #tpu.memory_space<vmem>>) attributes {dimension_semantics = [#tpu.dimension_semantics<parallel>], iteration_bounds = array<i64: 1>, scalar_prefetch = 0 : i64, scratch_operands = 0 : i64, tpu.core_type = #tpu.core_type<tc>, window_params = [{transform_indices = @transform_0, window_bounds = array<i64: 3>}, {transform_indices = @transform_1, window_bounds = array<i64: 8, 1024>}, {transform_indices = @transform_2, window_bounds = array<i64: 8, 1024>}]} {
    %c0 = arith.constant 0 : index
    %0 = memref.load %arg1[%c0] : memref<3xf32, #tpu.memory_space<smem>>
    %c1 = arith.constant 1 : index
    %1 = memref.load %arg1[%c1] : memref<3xf32, #tpu.memory_space<smem>>
    %c2 = arith.constant 2 : index
    %2 = memref.load %arg1[%c2] : memref<3xf32, #tpu.memory_space<smem>>
    %c0_0 = arith.constant 0 : index
    %c0_1 = arith.constant 0 : index
    %3 = vector.load %arg2[%c0_0, %c0_1] : memref<8x1024xf32, #tpu.memory_space<vmem>>, vector<8x1024xf32>
    %4 = vector.broadcast %1 : f32 to vector<8x1024xf32>
    %5 = arith.addf %4, %3 : vector<8x1024xf32>
    %6 = math.cos %5 : vector<8x1024xf32>
    %7 = vector.broadcast %0 : f32 to vector<8x1024xf32>
    %8 = arith.mulf %7, %6 : vector<8x1024xf32>
    %9 = vector.broadcast %2 : f32 to vector<8x1024xf32>
    %10 = arith.addf %8, %9 : vector<8x1024xf32>
    %c0_2 = arith.constant 0 : index
    %c0_3 = arith.constant 0 : index
    %11 = vector.load %arg3[%c0_2, %c0_3] : memref<8x1024xf32, #tpu.memory_space<vmem>>, vector<8x1024xf32>
    tpu.vector_store %arg3[%c0_2, %c0_3], %10 {strides = array<i32>} : memref<8x1024xf32, #tpu.memory_space<vmem>>, vector<8x1024xf32>,
    return
  }
  func.func @transform_0(%arg0: i32) -> i32 {
    %c0_i32 = arith.constant 0 : i32
    %c0_i32_0 = arith.constant 0 : i32
    return %c0_i32 : i32
  }
  func.func @transform_1(%arg0: i32) -> (i32, i32) {
    %c0_i32 = arith.constant 0 : i32
    %c0_i32_0 = arith.constant 0 : i32
    return %arg0, %c0_i32 : i32, i32
  }
  func.func @transform_2(%arg0: i32) -> (i32, i32) {
    %c0_i32 = arith.constant 0 : i32
    %c0_i32_0 = arith.constant 0 : i32
    return %arg0, %c0_i32 : i32, i32
  }
}

</mosaic_0001>

<llo_original>
// kernel: tpu_custom_call.1
$region0: #{tpu_custom_call.1}
  #allocation0 [shape = 'u32[]', space=smem, size = 0x4, offset = 0x4, fixed_abs, tag = 'smem constant byte address 0x4 - core index']
  #allocation1 [shape = 'u32[144,128]{1,0:T(1,128)}', space=vmem, size = 0x12000, scoped, tag = 'internal scratch']
  %s0 = inlined_call_operand.hbm [shape: f32[3], index: 0, kind: input, shape index: {}]
  %s1 = inlined_call_operand.hbm [shape: f32[8,1024], index: 1, kind: input, shape index: {}]
  %s2 = inlined_call_operand.hbm [shape: f32[8,1024], index: 2, kind: output, shape index: {}]
  %s3 = sld [smem:[#allocation0]]
  $region26: #{tpu_custom_call.1} parent=0
    _
  %s5 = ssub.s32 1, %s3
  %s6 = scalar_select 0, %s5, %s3
  $region1: #{tpu_custom_call.1} parent=0
    #allocation2 [shape = 'u8[512]{0}', space=smem, size = 0x200, scoped, tag = 'input window, operand 0, single buffered']
    #allocation3 [shape = 's32[1]{0}', space=sflag, size = 0x4, scoped, tag = 'scoped memory for tpu_custom_call.1']
    #allocation4 [shape = 's32[1]{0}', space=sflag, size = 0x4, scoped, tag = 'scoped memory for tpu_custom_call.1']
    #allocation5 [shape = 's32[1]{0}', space=sflag, size = 0x4, scoped, tag = 'scoped memory for tpu_custom_call.1']
    #allocation6 [shape = 'u8[32768]{0}', space=vmem, size = 0x8000, scoped, tag = 'input window, operand 1, single buffered']
    #allocation7 [shape = 'u8[32768]{0}', space=vmem, size = 0x8000, scoped, tag = 'output window, operand 0, single buffered']
    %7 = vsyncpa [#allocation5], 0
    %8 = vsyncpa [#allocation3], 0
    %9 = vsyncpa [#allocation4], 0
    // Predicated region
    $region2: #{tpu_custom_call.1} parent=1 // pred_check
      _
    $region3: #{tpu_custom_call.1} parent=1 // pred_check_branch
      %11 = sbr.rel (0) target = $region5
    $region4: #{tpu_custom_call.1} parent=1 // pred_region
      %s13 = ssub.s32 16, 16
      %14 = vsyncadd [#allocation5], %s13
      %17 = dma.hbm_to_smem %s0, 16, [#allocation2], [#allocation5]
    $region5: #{tpu_custom_call.1} parent=1 // pred_fallthru
      _
    // Predicated region
    $region6: #{tpu_custom_call.1} parent=1 // pred_check
      _
    $region7: #{tpu_custom_call.1} parent=1 // pred_check_branch
      %19 = sbr.rel (0) target = $region9
    $region8: #{tpu_custom_call.1} parent=1 // pred_region
      %s21 = ssub.s32 1024, 1024
      %22 = vsyncadd [#allocation3], %s21
      %s24 = sshll.u32 [#allocation6], 4
      %s25 = int_to_ptr.vmem [resolvable:$true] %s24
      %27 = dma.hbm_to_vmem [thread:$0]  %s1, 1024, %s25, [#allocation3]
    $region9: #{tpu_custom_call.1} parent=1 // pred_fallthru
      _
    // Predicated region
    $region10: #{tpu_custom_call.1} parent=1 // pred_check
      _
    $region11: #{tpu_custom_call.1} parent=1 // pred_check_branch
      %29 = sbr.rel (0) target = $region13
    $region12: #{tpu_custom_call.1} parent=1 // pred_region
      %30 = dma.done [#allocation5], 16
    $region13: #{tpu_custom_call.1} parent=1 // pred_fallthru
      _
    // Predicated region
    $region14: #{tpu_custom_call.1} parent=1 // pred_check
      _
    $region15: #{tpu_custom_call.1} parent=1 // pred_check_branch
      %32 = sbr.rel (0) target = $region17
    $region16: #{tpu_custom_call.1} parent=1 // pred_region
      %33 = dma.done [#allocation3], 1024
    $region17: #{tpu_custom_call.1} parent=1 // pred_fallthru
      _
    %34 = sfence
    %s35 = sld [smem:[#allocation2]]
    %s36 = sld [smem:[#allocation2 + $0x1]]
    %s37 = sld [smem:[#allocation2 + $0x2]]
    %v38 = vld [vmem:[#allocation6] sm:$0xff]
    %v39 = vld [vmem:[#allocation6 + $0x8] sm:$0xff]
    %v40 = vld [vmem:[#allocation6 + $0x10] sm:$0xff]
    %v41 = vld [vmem:[#allocation6 + $0x18] sm:$0xff]
    %v42 = vld [vmem:[#allocation6 + $0x20] sm:$0xff]
    %v43 = vld [vmem:[#allocation6 + $0x28] sm:$0xff]
    %v44 = vld [vmem:[#allocation6 + $0x30] sm:$0xff]
    %v45 = vld [vmem:[#allocation6 + $0x38] sm:$0xff]
    %v46 = vstv %s36
    %v47 = vadd.f32 %v46, %v38
    %v48 = vadd.f32 %v46, %v39
    %v49 = vadd.f32 %v46, %v40
    %v50 = vadd.f32 %v46, %v41
    %v51 = vadd.f32 %v46, %v42
    %v52 = vadd.f32 %v46, %v43
    %v53 = vadd.f32 %v46, %v44
    %v54 = vadd.f32 %v46, %v45
    %v55 = vand.u32 2147483647, %v47
    %vm56 = vcmp.le.f32.partialorder %v55, 0.7853982
    %vm57 = vcmp.lt.s32.totalorder %v47, 0
    %v58 = vand.u32 %v47, 2139095040
    %v59 = vshrl.u32 %v58, 23
    %v60 = vsub.s32 %v59, 127
    %v61 = vand.u32 2147483647, %v47
    %v62 = vand.u32 %v61, 8388607
    %v63 = vor.u32 %v62, 8388608
    %v64 = vsub.s32 0, %v63
    %v65 = vadd.s32 %v60, 1
    %vm66 = vcmp.gt.s32.totalorder %v65, 0
    %v67 = vsel %vm66, %v65, 0
    %v68 = vshrl.u32 %v67, 5
    %v69 = vand.u32 %v67, 31
    %v70 = vsub.s32 32, %v69
    %v71 = vshrl.u32 683565275, %v70
    %v72 = vshll.u32 683565275, %v69
    %v73 = vshrl.u32 2475754826, %v70
    %v74 = vor.u32 %v72, %v73
    %v75 = vshll.u32 2475754826, %v69
    %v76 = vshrl.u32 2131351028, %v70
    %v77 = vor.u32 %v75, %v76
    %v78 = vshll.u32 2131351028, %v69
    %v79 = vshrl.u32 2102212464, %v70
    %v80 = vor.u32 %v78, %v79
    %v81 = vshll.u32 2102212464, %v69
    %v82 = vshrl.u32 920167782, %v70
    %v83 = vor.u32 %v81, %v82
    %v84 = vshll.u32 920167782, %v69
    %v85 = vshrl.u32 1326507024, %v70
    %v86 = vor.u32 %v84, %v85
    %vm87 = vcmp.lt.s32.totalorder %v68, 1
    %vm88 = vcmp.lt.s32.totalorder %v68, 2
    %vm89 = vcmp.lt.s32.totalorder %v68, 3
    %vm90 = vcmp.lt.s32.totalorder %v68, 4
    %v91 = vsel %vm87, %v71, %v74
    %v92 = vsel %vm90, %v80, 2102212464
    %v93 = vsel %vm89, %v77, %v92
    %v94 = vsel %vm88, %v91, %v93
    %v95 = vsel %vm87, %v74, %v77
    %v96 = vsel %vm90, %v83, 920167782
    %v97 = vsel %vm89, %v80, %v96
    %v98 = vsel %vm88, %v95, %v97
    %v99 = vsel %vm87, %v77, %v80
    %v100 = vsel %vm90, %v86, 1326507024
    %v101 = vsel %vm89, %v83, %v100
    %v102 = vsel %vm88, %v99, %v101
    %v103 = vshll.u32 %v63, 8
    %v104 = vmul.u32.u64.compose %v103, %v102
    %v105 = vextract.low.u32 %v104
    %v106 = vextract.high.u32 %v104
    %v107 = vmul.u32.u64.compose %v103, %v98
    %v108 = vextract.low.u32 %v107
    %v109 = vextract.high.u32 %v107
    %v110 = vmul.u32 %v103, %v94
    %v111 = vadd.s32 %v106, %v108
    %vm112 = vc.u32 %v106, %v108
    %v113 = vadd.s32 %v109, 1
    %v114 = vsel %vm112, %v113, %v109
    %v115 = vadd.s32 %v110, %v114
    %v116 = vadd.s32 %v115, 536870912
    %v117 = vshrl.u32 %v116, 30
    %v118 = vshll.u32 %v117, 30
    %v119 = vsub.s32 %v115, %v118
    %vm120 = vcmp.lt.s32.totalorder %v119, 0
    %v121 = vsub.s32 0, %v119
    %v122 = vsel %vm120, %v121, %v119
    %v123 = vclz %v122
    %v124 = vsub.s32 %v123, 2
    %vm125 = vcmp.gt.s32.totalorder 0, %v124
    %v126 = vsel %vm125, 0, %v124
    %v127 = vsub.s32 32, %v126
    %v128 = vshll.u32 %v119, %v126
    %v129 = vshrl.u32 %v111, %v127
    %v130 = vor.u32 %v128, %v129
    %v131 = vsub.s32 4294967266, %v126
    %v132 = vadd.s32 %v131, 127
    %v133 = vshll.u32 %v132, 23
    %v134 = vor.u32 4788187, %v133
    %v135 = vand.u32 2147483647, %v134
    %v137 = vcvt.s32.f32 %v130
    %v138 = vmul.f32 %v137, %v135
    %v139 = vxor.u32 %v138, 2147483648
    %v140 = vsel %vm57, %v139, %v138
    %v141 = vsub.s32 4, %v117
    %v142 = vsel %vm57, %v141, %v117
    %v143 = vsel %vm56, %v47, %v140
    %v144 = vsel %vm56, 0, %v142
    %v145 = vcosq.f32.pop %v143
    %v146 = vsinq.f32.pop %v143
    %vm147 = vweird.f32 %v47
    %v148 = vand.u32 %v144, 3
    %vm149 = vcmp.lt.s32.totalorder %v148, 2
    %vm150 = vcmp.eq.s32.totalorder %v148, 0
    %v151 = vxor.u32 %v146, 2147483648
    %v152 = vsel %vm150, %v145, %v151
    %vm153 = vcmp.eq.s32.totalorder %v148, 2
    %v154 = vxor.u32 %v145, 2147483648
    %v155 = vsel %vm153, %v154, %v146
    %v156 = vsel %vm149, %v152, %v155
    %v157 = vsel %vm147, nan, %v156
    %v158 = vand.u32 2147483647, %v48
    %vm159 = vcmp.le.f32.partialorder %v158, 0.7853982
    %vm160 = vcmp.lt.s32.totalorder %v48, 0
    %v161 = vand.u32 %v48, 2139095040
    %v162 = vshrl.u32 %v161, 23
    %v163 = vsub.s32 %v162, 127
    %v164 = vand.u32 2147483647, %v48
    %v165 = vand.u32 %v164, 8388607
    %v166 = vor.u32 %v165, 8388608
    %v167 = vsub.s32 0, %v166
    %v168 = vadd.s32 %v163, 1
    %vm169 = vcmp.gt.s32.totalorder %v168, 0
    %v170 = vsel %vm169, %v168, 0
    %v171 = vshrl.u32 %v170, 5
    %v172 = vand.u32 %v170, 31
    %v173 = vsub.s32 32, %v172
    %v174 = vshrl.u32 683565275, %v173
    %v175 = vshll.u32 683565275, %v172
    %v176 = vshrl.u32 2475754826, %v173
    %v177 = vor.u32 %v175, %v176
    %v178 = vshll.u32 2475754826, %v172
    %v179 = vshrl.u32 2131351028, %v173
    %v180 = vor.u32 %v178, %v179
    %v181 = vshll.u32 2131351028, %v172
    %v182 = vshrl.u32 2102212464, %v173
    %v183 = vor.u32 %v181, %v182
    %v184 = vshll.u32 2102212464, %v172
    %v185 = vshrl.u32 920167782, %v173
    %v186 = vor.u32 %v184, %v185
    %v187 = vshll.u32 920167782, %v172
    %v188 = vshrl.u32 1326507024, %v173
    %v189 = vor.u32 %v187, %v188
    %vm190 = vcmp.lt.s32.totalorder %v171, 1
    %vm191 = vcmp.lt.s32.totalorder %v171, 2
    %vm192 = vcmp.lt.s32.totalorder %v171, 3
    %vm193 = vcmp.lt.s32.totalorder %v171, 4
    %v194 = vsel %vm190, %v174, %v177
    %v195 = vsel %vm193, %v183, 2102212464
    %v196 = vsel %vm192, %v180, %v195
    %v197 = vsel %vm191, %v194, %v196
    %v198 = vsel %vm190, %v177, %v180
    %v199 = vsel %vm193, %v186, 920167782
    %v200 = vsel %vm192, %v183, %v199
    %v201 = vsel %vm191, %v198, %v200
    %v202 = vsel %vm190, %v180, %v183
    %v203 = vsel %vm193, %v189, 1326507024
    %v204 = vsel %vm192, %v186, %v203
    %v205 = vsel %vm191, %v202, %v204
    %v206 = vshll.u32 %v166, 8
    %v207 = vmul.u32.u64.compose %v206, %v205
    %v208 = vextract.low.u32 %v207
    %v209 = vextract.high.u32 %v207
    %v210 = vmul.u32.u64.compose %v206, %v201
    %v211 = vextract.low.u32 %v210
    %v212 = vextract.high.u32 %v210
    %v213 = vmul.u32 %v206, %v197
    %v214 = vadd.s32 %v209, %v211
    %vm215 = vc.u32 %v209, %v211
    %v216 = vadd.s32 %v212, 1
    %v217 = vsel %vm215, %v216, %v212
    %v218 = vadd.s32 %v213, %v217
    %v219 = vadd.s32 %v218, 536870912
    %v220 = vshrl.u32 %v219, 30
    %v221 = vshll.u32 %v220, 30
    %v222 = vsub.s32 %v218, %v221
    %vm223 = vcmp.lt.s32.totalorder %v222, 0
    %v224 = vsub.s32 0, %v222
    %v225 = vsel %vm223, %v224, %v222
    %v226 = vclz %v225
    %v227 = vsub.s32 %v226, 2
    %vm228 = vcmp.gt.s32.totalorder 0, %v227
    %v229 = vsel %vm228, 0, %v227
    %v230 = vsub.s32 32, %v229
    %v231 = vshll.u32 %v222, %v229
    %v232 = vshrl.u32 %v214, %v230
    %v233 = vor.u32 %v231, %v232
    %v234 = vsub.s32 4294967266, %v229
    %v235 = vadd.s32 %v234, 127
    %v236 = vshll.u32 %v235, 23
    %v237 = vor.u32 4788187, %v236
    %v238 = vand.u32 2147483647, %v237
    %v240 = vcvt.s32.f32 %v233
    %v241 = vmul.f32 %v240, %v238
    %v242 = vxor.u32 %v241, 2147483648
    %v243 = vsel %vm160, %v242, %v241
    %v244 = vsub.s32 4, %v220
    %v245 = vsel %vm160, %v244, %v220
    %v246 = vsel %vm159, %v48, %v243
    %v247 = vsel %vm159, 0, %v245
    %v248 = vcosq.f32.pop %v246
    %v249 = vsinq.f32.pop %v246
    %vm250 = vweird.f32 %v48
    %v251 = vand.u32 %v247, 3
    %vm252 = vcmp.lt.s32.totalorder %v251, 2
    %vm253 = vcmp.eq.s32.totalorder %v251, 0
    %v254 = vxor.u32 %v249, 2147483648
    %v255 = vsel %vm253, %v248, %v254
    %vm256 = vcmp.eq.s32.totalorder %v251, 2
    %v257 = vxor.u32 %v248, 2147483648
    %v258 = vsel %vm256, %v257, %v249
    %v259 = vsel %vm252, %v255, %v258
    %v260 = vsel %vm250, nan, %v259
    %v261 = vand.u32 2147483647, %v49
    %vm262 = vcmp.le.f32.partialorder %v261, 0.7853982
    %vm263 = vcmp.lt.s32.totalorder %v49, 0
    %v264 = vand.u32 %v49, 2139095040
    %v265 = vshrl.u32 %v264, 23
    %v266 = vsub.s32 %v265, 127
    %v267 = vand.u32 2147483647, %v49
    %v268 = vand.u32 %v267, 8388607
    %v269 = vor.u32 %v268, 8388608
    %v270 = vsub.s32 0, %v269
    %v271 = vadd.s32 %v266, 1
    %vm272 = vcmp.gt.s32.totalorder %v271, 0
    %v273 = vsel %vm272, %v271, 0
    %v274 = vshrl.u32 %v273, 5
    %v275 = vand.u32 %v273, 31
    %v276 = vsub.s32 32, %v275
    %v277 = vshrl.u32 683565275, %v276
    %v278 = vshll.u32 683565275, %v275
    %v279 = vshrl.u32 2475754826, %v276
    %v280 = vor.u32 %v278, %v279
    %v281 = vshll.u32 2475754826, %v275
    %v282 = vshrl.u32 2131351028, %v276
    %v283 = vor.u32 %v281, %v282
    %v284 = vshll.u32 2131351028, %v275
    %v285 = vshrl.u32 2102212464, %v276
    %v286 = vor.u32 %v284, %v285
    %v287 = vshll.u32 2102212464, %v275
    %v288 = vshrl.u32 920167782, %v276
    %v289 = vor.u32 %v287, %v288
    %v290 = vshll.u32 920167782, %v275
    %v291 = vshrl.u32 1326507024, %v276
    %v292 = vor.u32 %v290, %v291
    %vm293 = vcmp.lt.s32.totalorder %v274, 1
    %vm294 = vcmp.lt.s32.totalorder %v274, 2
    %vm295 = vcmp.lt.s32.totalorder %v274, 3
    %vm296 = vcmp.lt.s32.totalorder %v274, 4
    %v297 = vsel %vm293, %v277, %v280
    %v298 = vsel %vm296, %v286, 2102212464
    %v299 = vsel %vm295, %v283, %v298
    %v300 = vsel %vm294, %v297, %v299
    %v301 = vsel %vm293, %v280, %v283
    %v302 = vsel %vm296, %v289, 920167782
    %v303 = vsel %vm295, %v286, %v302
    %v304 = vsel %vm294, %v301, %v303
    %v305 = vsel %vm293, %v283, %v286
    %v306 = vsel %vm296, %v292, 1326507024
    %v307 = vsel %vm295, %v289, %v306
    %v308 = vsel %vm294, %v305, %v307
    %v309 = vshll.u32 %v269, 8
    %v310 = vmul.u32.u64.compose %v309, %v308
    %v311 = vextract.low.u32 %v310
    %v312 = vextract.high.u32 %v310
    %v313 = vmul.u32.u64.compose %v309, %v304
    %v314 = vextract.low.u32 %v313
    %v315 = vextract.high.u32 %v313
    %v316 = vmul.u32 %v309, %v300
    %v317 = vadd.s32 %v312, %v314
    %vm318 = vc.u32 %v312, %v314
    %v319 = vadd.s32 %v315, 1
    %v320 = vsel %vm318, %v319, %v315
    %v321 = vadd.s32 %v316, %v320
    %v322 = vadd.s32 %v321, 536870912
    %v323 = vshrl.u32 %v322, 30
    %v324 = vshll.u32 %v323, 30
    %v325 = vsub.s32 %v321, %v324
    %vm326 = vcmp.lt.s32.totalorder %v325, 0
    %v327 = vsub.s32 0, %v325
    %v328 = vsel %vm326, %v327, %v325
    %v329 = vclz %v328
    %v330 = vsub.s32 %v329, 2
    %vm331 = vcmp.gt.s32.totalorder 0, %v330
    %v332 = vsel %vm331, 0, %v330
    %v333 = vsub.s32 32, %v332
    %v334 = vshll.u32 %v325, %v332
    %v335 = vshrl.u32 %v317, %v333
    %v336 = vor.u32 %v334, %v335
    %v337 = vsub.s32 4294967266, %v332
    %v338 = vadd.s32 %v337, 127
    %v339 = vshll.u32 %v338, 23
    %v340 = vor.u32 4788187, %v339
    %v341 = vand.u32 2147483647, %v340
    %v343 = vcvt.s32.f32 %v336
    %v344 = vmul.f32 %v343, %v341
    %v345 = vxor.u32 %v344, 2147483648
    %v346 = vsel %vm263, %v345, %v344
    %v347 = vsub.s32 4, %v323
    %v348 = vsel %vm263, %v347, %v323
    %v349 = vsel %vm262, %v49, %v346
    %v350 = vsel %vm262, 0, %v348
    %v351 = vcosq.f32.pop %v349
    %v352 = vsinq.f32.pop %v349
    %vm353 = vweird.f32 %v49
    %v354 = vand.u32 %v350, 3
    %vm355 = vcmp.lt.s32.totalorder %v354, 2
    %vm356 = vcmp.eq.s32.totalorder %v354, 0
    %v357 = vxor.u32 %v352, 2147483648
    %v358 = vsel %vm356, %v351, %v357
    %vm359 = vcmp.eq.s32.totalorder %v354, 2
    %v360 = vxor.u32 %v351, 2147483648
    %v361 = vsel %vm359, %v360, %v352
    %v362 = vsel %vm355, %v358, %v361
    %v363 = vsel %vm353, nan, %v362
    %v364 = vand.u32 2147483647, %v50
    %vm365 = vcmp.le.f32.partialorder %v364, 0.7853982
    %vm366 = vcmp.lt.s32.totalorder %v50, 0
    %v367 = vand.u32 %v50, 2139095040
    %v368 = vshrl.u32 %v367, 23
    %v369 = vsub.s32 %v368, 127
    %v370 = vand.u32 2147483647, %v50
    %v371 = vand.u32 %v370, 8388607
    %v372 = vor.u32 %v371, 8388608
    %v373 = vsub.s32 0, %v372
    %v374 = vadd.s32 %v369, 1
    %vm375 = vcmp.gt.s32.totalorder %v374, 0
    %v376 = vsel %vm375, %v374, 0
    %v377 = vshrl.u32 %v376, 5
    %v378 = vand.u32 %v376, 31
    %v379 = vsub.s32 32, %v378
    %v380 = vshrl.u32 683565275, %v379
    %v381 = vshll.u32 683565275, %v378
    %v382 = vshrl.u32 2475754826, %v379
    %v383 = vor.u32 %v381, %v382
    %v384 = vshll.u32 2475754826, %v378
    %v385 = vshrl.u32 2131351028, %v379
    %v386 = vor.u32 %v384, %v385
    %v387 = vshll.u32 2131351028, %v378
    %v388 = vshrl.u32 2102212464, %v379
    %v389 = vor.u32 %v387, %v388
    %v390 = vshll.u32 2102212464, %v378
    %v391 = vshrl.u32 920167782, %v379
    %v392 = vor.u32 %v390, %v391
    %v393 = vshll.u32 920167782, %v378
    %v394 = vshrl.u32 1326507024, %v379
    %v395 = vor.u32 %v393, %v394
    %vm396 = vcmp.lt.s32.totalorder %v377, 1
    %vm397 = vcmp.lt.s32.totalorder %v377, 2
    %vm398 = vcmp.lt.s32.totalorder %v377, 3
    %vm399 = vcmp.lt.s32.totalorder %v377, 4
    %v400 = vsel %vm396, %v380, %v383
    %v401 = vsel %vm399, %v389, 2102212464
    %v402 = vsel %vm398, %v386, %v401
    %v403 = vsel %vm397, %v400, %v402
    %v404 = vsel %vm396, %v383, %v386
    %v405 = vsel %vm399, %v392, 920167782
    %v406 = vsel %vm398, %v389, %v405
    %v407 = vsel %vm397, %v404, %v406
    %v408 = vsel %vm396, %v386, %v389
    %v409 = vsel %vm399, %v395, 1326507024
    %v410 = vsel %vm398, %v392, %v409
    %v411 = vsel %vm397, %v408, %v410
    %v412 = vshll.u32 %v372, 8
    %v413 = vmul.u32.u64.compose %v412, %v411
    %v414 = vextract.low.u32 %v413
    %v415 = vextract.high.u32 %v413
    %v416 = vmul.u32.u64.compose %v412, %v407
    %v417 = vextract.low.u32 %v416
    %v418 = vextract.high.u32 %v416
    %v419 = vmul.u32 %v412, %v403
    %v420 = vadd.s32 %v415, %v417
    %vm421 = vc.u32 %v415, %v417
    %v422 = vadd.s32 %v418, 1
    %v423 = vsel %vm421, %v422, %v418
    %v424 = vadd.s32 %v419, %v423
    %v425 = vadd.s32 %v424, 536870912
    %v426 = vshrl.u32 %v425, 30
    %v427 = vshll.u32 %v426, 30
    %v428 = vsub.s32 %v424, %v427
    %vm429 = vcmp.lt.s32.totalorder %v428, 0
    %v430 = vsub.s32 0, %v428
    %v431 = vsel %vm429, %v430, %v428
    %v432 = vclz %v431
    %v433 = vsub.s32 %v432, 2
    %vm434 = vcmp.gt.s32.totalorder 0, %v433
    %v435 = vsel %vm434, 0, %v433
    %v436 = vsub.s32 32, %v435
    %v437 = vshll.u32 %v428, %v435
    %v438 = vshrl.u32 %v420, %v436
    %v439 = vor.u32 %v437, %v438
    %v440 = vsub.s32 4294967266, %v435
    %v441 = vadd.s32 %v440, 127
    %v442 = vshll.u32 %v441, 23
    %v443 = vor.u32 4788187, %v442
    %v444 = vand.u32 2147483647, %v443
    %v446 = vcvt.s32.f32 %v439
    %v447 = vmul.f32 %v446, %v444
    %v448 = vxor.u32 %v447, 2147483648
    %v449 = vsel %vm366, %v448, %v447
    %v450 = vsub.s32 4, %v426
    %v451 = vsel %vm366, %v450, %v426
    %v452 = vsel %vm365, %v50, %v449
    %v453 = vsel %vm365, 0, %v451
    %v454 = vcosq.f32.pop %v452
    %v455 = vsinq.f32.pop %v452
    %vm456 = vweird.f32 %v50
    %v457 = vand.u32 %v453, 3
    %vm458 = vcmp.lt.s32.totalorder %v457, 2
    %vm459 = vcmp.eq.s32.totalorder %v457, 0
    %v460 = vxor.u32 %v455, 2147483648
    %v461 = vsel %vm459, %v454, %v460
    %vm462 = vcmp.eq.s32.totalorder %v457, 2
    %v463 = vxor.u32 %v454, 2147483648
    %v464 = vsel %vm462, %v463, %v455
    %v465 = vsel %vm458, %v461, %v464
    %v466 = vsel %vm456, nan, %v465
    %v467 = vand.u32 2147483647, %v51
    %vm468 = vcmp.le.f32.partialorder %v467, 0.7853982
    %vm469 = vcmp.lt.s32.totalorder %v51, 0
    %v470 = vand.u32 %v51, 2139095040
    %v471 = vshrl.u32 %v470, 23
    %v472 = vsub.s32 %v471, 127
    %v473 = vand.u32 2147483647, %v51
    %v474 = vand.u32 %v473, 8388607
    %v475 = vor.u32 %v474, 8388608
    %v476 = vsub.s32 0, %v475
    %v477 = vadd.s32 %v472, 1
    %vm478 = vcmp.gt.s32.totalorder %v477, 0
    %v479 = vsel %vm478, %v477, 0
    %v480 = vshrl.u32 %v479, 5
    %v481 = vand.u32 %v479, 31
    %v482 = vsub.s32 32, %v481
    %v483 = vshrl.u32 683565275, %v482
    %v484 = vshll.u32 683565275, %v481
    %v485 = vshrl.u32 2475754826, %v482
    %v486 = vor.u32 %v484, %v485
    %v487 = vshll.u32 2475754826, %v481
    %v488 = vshrl.u32 2131351028, %v482
    %v489 = vor.u32 %v487, %v488
    %v490 = vshll.u32 2131351028, %v481
    %v491 = vshrl.u32 2102212464, %v482
    %v492 = vor.u32 %v490, %v491
    %v493 = vshll.u32 2102212464, %v481
    %v494 = vshrl.u32 920167782, %v482
    %v495 = vor.u32 %v493, %v494
    %v496 = vshll.u32 920167782, %v481
    %v497 = vshrl.u32 1326507024, %v482
    %v498 = vor.u32 %v496, %v497
    %vm499 = vcmp.lt.s32.totalorder %v480, 1
    %vm500 = vcmp.lt.s32.totalorder %v480, 2
    %vm501 = vcmp.lt.s32.totalorder %v480, 3
    %vm502 = vcmp.lt.s32.totalorder %v480, 4
    %v503 = vsel %vm499, %v483, %v486
    %v504 = vsel %vm502, %v492, 2102212464
    %v505 = vsel %vm501, %v489, %v504
    %v506 = vsel %vm500, %v503, %v505
    %v507 = vsel %vm499, %v486, %v489
    %v508 = vsel %vm502, %v495, 920167782
    %v509 = vsel %vm501, %v492, %v508
    %v510 = vsel %vm500, %v507, %v509
    %v511 = vsel %vm499, %v489, %v492
    %v512 = vsel %vm502, %v498, 1326507024
    %v513 = vsel %vm501, %v495, %v512
    %v514 = vsel %vm500, %v511, %v513
    %v515 = vshll.u32 %v475, 8
    %v516 = vmul.u32.u64.compose %v515, %v514
    %v517 = vextract.low.u32 %v516
    %v518 = vextract.high.u32 %v516
    %v519 = vmul.u32.u64.compose %v515, %v510
    %v520 = vextract.low.u32 %v519
    %v521 = vextract.high.u32 %v519
    %v522 = vmul.u32 %v515, %v506
    %v523 = vadd.s32 %v518, %v520
    %vm524 = vc.u32 %v518, %v520
    %v525 = vadd.s32 %v521, 1
    %v526 = vsel %vm524, %v525, %v521
    %v527 = vadd.s32 %v522, %v526
    %v528 = vadd.s32 %v527, 536870912
    %v529 = vshrl.u32 %v528, 30
    %v530 = vshll.u32 %v529, 30
    %v531 = vsub.s32 %v527, %v530
    %vm532 = vcmp.lt.s32.totalorder %v531, 0
    %v533 = vsub.s32 0, %v531
    %v534 = vsel %vm532, %v533, %v531
    %v535 = vclz %v534
    %v536 = vsub.s32 %v535, 2
    %vm537 = vcmp.gt.s32.totalorder 0, %v536
    %v538 = vsel %vm537, 0, %v536
    %v539 = vsub.s32 32, %v538
    %v540 = vshll.u32 %v531, %v538
    %v541 = vshrl.u32 %v523, %v539
    %v542 = vor.u32 %v540, %v541
    %v543 = vsub.s32 4294967266, %v538
    %v544 = vadd.s32 %v543, 127
    %v545 = vshll.u32 %v544, 23
    %v546 = vor.u32 4788187, %v545
    %v547 = vand.u32 2147483647, %v546
    %v549 = vcvt.s32.f32 %v542
    %v550 = vmul.f32 %v549, %v547
    %v551 = vxor.u32 %v550, 2147483648
    %v552 = vsel %vm469, %v551, %v550
    %v553 = vsub.s32 4, %v529
    %v554 = vsel %vm469, %v553, %v529
    %v555 = vsel %vm468, %v51, %v552
    %v556 = vsel %vm468, 0, %v554
    %v557 = vcosq.f32.pop %v555
    %v558 = vsinq.f32.pop %v555
    %vm559 = vweird.f32 %v51
    %v560 = vand.u32 %v556, 3
    %vm561 = vcmp.lt.s32.totalorder %v560, 2
    %vm562 = vcmp.eq.s32.totalorder %v560, 0
    %v563 = vxor.u32 %v558, 2147483648
    %v564 = vsel %vm562, %v557, %v563
    %vm565 = vcmp.eq.s32.totalorder %v560, 2
    %v566 = vxor.u32 %v557, 2147483648
    %v567 = vsel %vm565, %v566, %v558
    %v568 = vsel %vm561, %v564, %v567
    %v569 = vsel %vm559, nan, %v568
    %v570 = vand.u32 2147483647, %v52
    %vm571 = vcmp.le.f32.partialorder %v570, 0.7853982
    %vm572 = vcmp.lt.s32.totalorder %v52, 0
    %v573 = vand.u32 %v52, 2139095040
    %v574 = vshrl.u32 %v573, 23
    %v575 = vsub.s32 %v574, 127
    %v576 = vand.u32 2147483647, %v52
    %v577 = vand.u32 %v576, 8388607
    %v578 = vor.u32 %v577, 8388608
    %v579 = vsub.s32 0, %v578
    %v580 = vadd.s32 %v575, 1
    %vm581 = vcmp.gt.s32.totalorder %v580, 0
    %v582 = vsel %vm581, %v580, 0
    %v583 = vshrl.u32 %v582, 5
    %v584 = vand.u32 %v582, 31
    %v585 = vsub.s32 32, %v584
    %v586 = vshrl.u32 683565275, %v585
    %v587 = vshll.u32 683565275, %v584
    %v588 = vshrl.u32 2475754826, %v585
    %v589 = vor.u32 %v587, %v588
    %v590 = vshll.u32 2475754826, %v584
    %v591 = vshrl.u32 2131351028, %v585
    %v592 = vor.u32 %v590, %v591
    %v593 = vshll.u32 2131351028, %v584
    %v594 = vshrl.u32 2102212464, %v585
    %v595 = vor.u32 %v593, %v594
    %v596 = vshll.u32 2102212464, %v584
    %v597 = vshrl.u32 920167782, %v585
    %v598 = vor.u32 %v596, %v597
    %v599 = vshll.u32 920167782, %v584
    %v600 = vshrl.u32 1326507024, %v585
    %v601 = vor.u32 %v599, %v600
    %vm602 = vcmp.lt.s32.totalorder %v583, 1
    %vm603 = vcmp.lt.s32.totalorder %v583, 2
    %vm604 = vcmp.lt.s32.totalorder %v583, 3
    %vm605 = vcmp.lt.s32.totalorder %v583, 4
    %v606 = vsel %vm602, %v586, %v589
    %v607 = vsel %vm605, %v595, 2102212464
    %v608 = vsel %vm604, %v592, %v607
    %v609 = vsel %vm603, %v606, %v608
    %v610 = vsel %vm602, %v589, %v592
    %v611 = vsel %vm605, %v598, 920167782
    %v612 = vsel %vm604, %v595, %v611
    %v613 = vsel %vm603, %v610, %v612
    %v614 = vsel %vm602, %v592, %v595
    %v615 = vsel %vm605, %v601, 1326507024
    %v616 = vsel %vm604, %v598, %v615
    %v617 = vsel %vm603, %v614, %v616
    %v618 = vshll.u32 %v578, 8
    %v619 = vmul.u32.u64.compose %v618, %v617
    %v620 = vextract.low.u32 %v619
    %v621 = vextract.high.u32 %v619
    %v622 = vmul.u32.u64.compose %v618, %v613
    %v623 = vextract.low.u32 %v622
    %v624 = vextract.high.u32 %v622
    %v625 = vmul.u32 %v618, %v609
    %v626 = vadd.s32 %v621, %v623
    %vm627 = vc.u32 %v621, %v623
    %v628 = vadd.s32 %v624, 1
    %v629 = vsel %vm627, %v628, %v624
    %v630 = vadd.s32 %v625, %v629
    %v631 = vadd.s32 %v630, 536870912
    %v632 = vshrl.u32 %v631, 30
    %v633 = vshll.u32 %v632, 30
    %v634 = vsub.s32 %v630, %v633
    %vm635 = vcmp.lt.s32.totalorder %v634, 0
    %v636 = vsub.s32 0, %v634
    %v637 = vsel %vm635, %v636, %v634
    %v638 = vclz %v637
    %v639 = vsub.s32 %v638, 2
    %vm640 = vcmp.gt.s32.totalorder 0, %v639
    %v641 = vsel %vm640, 0, %v639
    %v642 = vsub.s32 32, %v641
    %v643 = vshll.u32 %v634, %v641
    %v644 = vshrl.u32 %v626, %v642
    %v645 = vor.u32 %v643, %v644
    %v646 = vsub.s32 4294967266, %v641
    %v647 = vadd.s32 %v646, 127
    %v648 = vshll.u32 %v647, 23
    %v649 = vor.u32 4788187, %v648
    %v650 = vand.u32 2147483647, %v649
    %v652 = vcvt.s32.f32 %v645
    %v653 = vmul.f32 %v652, %v650
    %v654 = vxor.u32 %v653, 2147483648
    %v655 = vsel %vm572, %v654, %v653
    %v656 = vsub.s32 4, %v632
    %v657 = vsel %vm572, %v656, %v632
    %v658 = vsel %vm571, %v52, %v655
    %v659 = vsel %vm571, 0, %v657
    %v660 = vcosq.f32.pop %v658
    %v661 = vsinq.f32.pop %v658
    %vm662 = vweird.f32 %v52
    %v663 = vand.u32 %v659, 3
    %vm664 = vcmp.lt.s32.totalorder %v663, 2
    %vm665 = vcmp.eq.s32.totalorder %v663, 0
    %v666 = vxor.u32 %v661, 2147483648
    %v667 = vsel %vm665, %v660, %v666
    %vm668 = vcmp.eq.s32.totalorder %v663, 2
    %v669 = vxor.u32 %v660, 2147483648
    %v670 = vsel %vm668, %v669, %v661
    %v671 = vsel %vm664, %v667, %v670
    %v672 = vsel %vm662, nan, %v671
    %v673 = vand.u32 2147483647, %v53
    %vm674 = vcmp.le.f32.partialorder %v673, 0.7853982
    %vm675 = vcmp.lt.s32.totalorder %v53, 0
    %v676 = vand.u32 %v53, 2139095040
    %v677 = vshrl.u32 %v676, 23
    %v678 = vsub.s32 %v677, 127
    %v679 = vand.u32 2147483647, %v53
    %v680 = vand.u32 %v679, 8388607
    %v681 = vor.u32 %v680, 8388608
    %v682 = vsub.s32 0, %v681
    %v683 = vadd.s32 %v678, 1
    %vm684 = vcmp.gt.s32.totalorder %v683, 0
    %v685 = vsel %vm684, %v683, 0
    %v686 = vshrl.u32 %v685, 5
    %v687 = vand.u32 %v685, 31
    %v688 = vsub.s32 32, %v687
    %v689 = vshrl.u32 683565275, %v688
    %v690 = vshll.u32 683565275, %v687
    %v691 = vshrl.u32 2475754826, %v688
    %v692 = vor.u32 %v690, %v691
    %v693 = vshll.u32 2475754826, %v687
    %v694 = vshrl.u32 2131351028, %v688
    %v695 = vor.u32 %v693, %v694
    %v696 = vshll.u32 2131351028, %v687
    %v697 = vshrl.u32 2102212464, %v688
    %v698 = vor.u32 %v696, %v697
    %v699 = vshll.u32 2102212464, %v687
    %v700 = vshrl.u32 920167782, %v688
    %v701 = vor.u32 %v699, %v700
    %v702 = vshll.u32 920167782, %v687
    %v703 = vshrl.u32 1326507024, %v688
    %v704 = vor.u32 %v702, %v703
    %vm705 = vcmp.lt.s32.totalorder %v686, 1
    %vm706 = vcmp.lt.s32.totalorder %v686, 2
    %vm707 = vcmp.lt.s32.totalorder %v686, 3
    %vm708 = vcmp.lt.s32.totalorder %v686, 4
    %v709 = vsel %vm705, %v689, %v692
    %v710 = vsel %vm708, %v698, 2102212464
    %v711 = vsel %vm707, %v695, %v710
    %v712 = vsel %vm706, %v709, %v711
    %v713 = vsel %vm705, %v692, %v695
    %v714 = vsel %vm708, %v701, 920167782
    %v715 = vsel %vm707, %v698, %v714
    %v716 = vsel %vm706, %v713, %v715
    %v717 = vsel %vm705, %v695, %v698
    %v718 = vsel %vm708, %v704, 1326507024
    %v719 = vsel %vm707, %v701, %v718
    %v720 = vsel %vm706, %v717, %v719
    %v721 = vshll.u32 %v681, 8
    %v722 = vmul.u32.u64.compose %v721, %v720
    %v723 = vextract.low.u32 %v722
    %v724 = vextract.high.u32 %v722
    %v725 = vmul.u32.u64.compose %v721, %v716
    %v726 = vextract.low.u32 %v725
    %v727 = vextract.high.u32 %v725
    %v728 = vmul.u32 %v721, %v712
    %v729 = vadd.s32 %v724, %v726
    %vm730 = vc.u32 %v724, %v726
    %v731 = vadd.s32 %v727, 1
    %v732 = vsel %vm730, %v731, %v727
    %v733 = vadd.s32 %v728, %v732
    %v734 = vadd.s32 %v733, 536870912
    %v735 = vshrl.u32 %v734, 30
    %v736 = vshll.u32 %v735, 30
    %v737 = vsub.s32 %v733, %v736
    %vm738 = vcmp.lt.s32.totalorder %v737, 0
    %v739 = vsub.s32 0, %v737
    %v740 = vsel %vm738, %v739, %v737
    %v741 = vclz %v740
    %v742 = vsub.s32 %v741, 2
    %vm743 = vcmp.gt.s32.totalorder 0, %v742
    %v744 = vsel %vm743, 0, %v742
    %v745 = vsub.s32 32, %v744
    %v746 = vshll.u32 %v737, %v744
    %v747 = vshrl.u32 %v729, %v745
    %v748 = vor.u32 %v746, %v747
    %v749 = vsub.s32 4294967266, %v744
    %v750 = vadd.s32 %v749, 127
    %v751 = vshll.u32 %v750, 23
    %v752 = vor.u32 4788187, %v751
    %v753 = vand.u32 2147483647, %v752
    %v755 = vcvt.s32.f32 %v748
    %v756 = vmul.f32 %v755, %v753
    %v757 = vxor.u32 %v756, 2147483648
    %v758 = vsel %vm675, %v757, %v756
    %v759 = vsub.s32 4, %v735
    %v760 = vsel %vm675, %v759, %v735
    %v761 = vsel %vm674, %v53, %v758
    %v762 = vsel %vm674, 0, %v760
    %v763 = vcosq.f32.pop %v761
    %v764 = vsinq.f32.pop %v761
    %vm765 = vweird.f32 %v53
    %v766 = vand.u32 %v762, 3
    %vm767 = vcmp.lt.s32.totalorder %v766, 2
    %vm768 = vcmp.eq.s32.totalorder %v766, 0
    %v769 = vxor.u32 %v764, 2147483648
    %v770 = vsel %vm768, %v763, %v769
    %vm771 = vcmp.eq.s32.totalorder %v766, 2
    %v772 = vxor.u32 %v763, 2147483648
    %v773 = vsel %vm771, %v772, %v764
    %v774 = vsel %vm767, %v770, %v773
    %v775 = vsel %vm765, nan, %v774
    %v776 = vand.u32 2147483647, %v54
    %vm777 = vcmp.le.f32.partialorder %v776, 0.7853982
    %vm778 = vcmp.lt.s32.totalorder %v54, 0
    %v779 = vand.u32 %v54, 2139095040
    %v780 = vshrl.u32 %v779, 23
    %v781 = vsub.s32 %v780, 127
    %v782 = vand.u32 2147483647, %v54
    %v783 = vand.u32 %v782, 8388607
    %v784 = vor.u32 %v783, 8388608
    %v785 = vsub.s32 0, %v784
    %v786 = vadd.s32 %v781, 1
    %vm787 = vcmp.gt.s32.totalorder %v786, 0
    %v788 = vsel %vm787, %v786, 0
    %v789 = vshrl.u32 %v788, 5
    %v790 = vand.u32 %v788, 31
    %v791 = vsub.s32 32, %v790
    %v792 = vshrl.u32 683565275, %v791
    %v793 = vshll.u32 683565275, %v790
    %v794 = vshrl.u32 2475754826, %v791
    %v795 = vor.u32 %v793, %v794
    %v796 = vshll.u32 2475754826, %v790
    %v797 = vshrl.u32 2131351028, %v791
    %v798 = vor.u32 %v796, %v797
    %v799 = vshll.u32 2131351028, %v790
    %v800 = vshrl.u32 2102212464, %v791
    %v801 = vor.u32 %v799, %v800
    %v802 = vshll.u32 2102212464, %v790
    %v803 = vshrl.u32 920167782, %v791
    %v804 = vor.u32 %v802, %v803
    %v805 = vshll.u32 920167782, %v790
    %v806 = vshrl.u32 1326507024, %v791
    %v807 = vor.u32 %v805, %v806
    %vm808 = vcmp.lt.s32.totalorder %v789, 1
    %vm809 = vcmp.lt.s32.totalorder %v789, 2
    %vm810 = vcmp.lt.s32.totalorder %v789, 3
    %vm811 = vcmp.lt.s32.totalorder %v789, 4
    %v812 = vsel %vm808, %v792, %v795
    %v813 = vsel %vm811, %v801, 2102212464
    %v814 = vsel %vm810, %v798, %v813
    %v815 = vsel %vm809, %v812, %v814
    %v816 = vsel %vm808, %v795, %v798
    %v817 = vsel %vm811, %v804, 920167782
    %v818 = vsel %vm810, %v801, %v817
    %v819 = vsel %vm809, %v816, %v818
    %v820 = vsel %vm808, %v798, %v801
    %v821 = vsel %vm811, %v807, 1326507024
    %v822 = vsel %vm810, %v804, %v821
    %v823 = vsel %vm809, %v820, %v822
    %v824 = vshll.u32 %v784, 8
    %v825 = vmul.u32.u64.compose %v824, %v823
    %v826 = vextract.low.u32 %v825
    %v827 = vextract.high.u32 %v825
    %v828 = vmul.u32.u64.compose %v824, %v819
    %v829 = vextract.low.u32 %v828
    %v830 = vextract.high.u32 %v828
    %v831 = vmul.u32 %v824, %v815
    %v832 = vadd.s32 %v827, %v829
    %vm833 = vc.u32 %v827, %v829
    %v834 = vadd.s32 %v830, 1
    %v835 = vsel %vm833, %v834, %v830
    %v836 = vadd.s32 %v831, %v835
    %v837 = vadd.s32 %v836, 536870912
    %v838 = vshrl.u32 %v837, 30
    %v839 = vshll.u32 %v838, 30
    %v840 = vsub.s32 %v836, %v839
    %vm841 = vcmp.lt.s32.totalorder %v840, 0
    %v842 = vsub.s32 0, %v840
    %v843 = vsel %vm841, %v842, %v840
    %v844 = vclz %v843
    %v845 = vsub.s32 %v844, 2
    %vm846 = vcmp.gt.s32.totalorder 0, %v845
    %v847 = vsel %vm846, 0, %v845
    %v848 = vsub.s32 32, %v847
    %v849 = vshll.u32 %v840, %v847
    %v850 = vshrl.u32 %v832, %v848
    %v851 = vor.u32 %v849, %v850
    %v852 = vsub.s32 4294967266, %v847
    %v853 = vadd.s32 %v852, 127
    %v854 = vshll.u32 %v853, 23
    %v855 = vor.u32 4788187, %v854
    %v856 = vand.u32 2147483647, %v855
    %v858 = vcvt.s32.f32 %v851
    %v859 = vmul.f32 %v858, %v856
    %v860 = vxor.u32 %v859, 2147483648
    %v861 = vsel %vm778, %v860, %v859
    %v862 = vsub.s32 4, %v838
    %v863 = vsel %vm778, %v862, %v838
    %v864 = vsel %vm777, %v54, %v861
    %v865 = vsel %vm777, 0, %v863
    %v866 = vcosq.f32.pop %v864
    %v867 = vsinq.f32.pop %v864
    %vm868 = vweird.f32 %v54
    %v869 = vand.u32 %v865, 3
    %vm870 = vcmp.lt.s32.totalorder %v869, 2
    %vm871 = vcmp.eq.s32.totalorder %v869, 0
    %v872 = vxor.u32 %v867, 2147483648
    %v873 = vsel %vm871, %v866, %v872
    %vm874 = vcmp.eq.s32.totalorder %v869, 2
    %v875 = vxor.u32 %v866, 2147483648
    %v876 = vsel %vm874, %v875, %v867
    %v877 = vsel %vm870, %v873, %v876
    %v878 = vsel %vm868, nan, %v877
    %v879 = vstv %s35
    %v880 = vmul.f32 %v879, %v157
    %v881 = vmul.f32 %v879, %v260
    %v882 = vmul.f32 %v879, %v363
    %v883 = vmul.f32 %v879, %v466
    %v884 = vmul.f32 %v879, %v569
    %v885 = vmul.f32 %v879, %v672
    %v886 = vmul.f32 %v879, %v775
    %v887 = vmul.f32 %v879, %v878
    %v888 = vstv %s37
    %v889 = vadd.f32 %v880, %v888
    %v890 = vadd.f32 %v881, %v888
    %v891 = vadd.f32 %v882, %v888
    %v892 = vadd.f32 %v883, %v888
    %v893 = vadd.f32 %v884, %v888
    %v894 = vadd.f32 %v885, %v888
    %v895 = vadd.f32 %v886, %v888
    %v896 = vadd.f32 %v887, %v888
    %897 = vst [vmem:[#allocation7] sm:$0xff] %v889
    %898 = vst [vmem:[#allocation7 + $0x8] sm:$0xff] %v890
    %899 = vst [vmem:[#allocation7 + $0x10] sm:$0xff] %v891
    %900 = vst [vmem:[#allocation7 + $0x18] sm:$0xff] %v892
    %901 = vst [vmem:[#allocation7 + $0x20] sm:$0xff] %v893
    %902 = vst [vmem:[#allocation7 + $0x28] sm:$0xff] %v894
    %903 = vst [vmem:[#allocation7 + $0x30] sm:$0xff] %v895
    %904 = vst [vmem:[#allocation7 + $0x38] sm:$0xff] %v896
    // Predicated region
    $region18: #{tpu_custom_call.1} parent=1 // pred_check
      _
    $region19: #{tpu_custom_call.1} parent=1 // pred_check_branch
      %906 = sbr.rel (0) target = $region21
    $region20: #{tpu_custom_call.1} parent=1 // pred_region
      %s908 = ssub.s32 1024, 1024
      %909 = vsyncadd [#allocation4], %s908
      %s911 = sshll.u32 [#allocation7], 4
      %s912 = int_to_ptr.vmem [resolvable:$true] %s911
      %914 = dma.vmem_to_hbm [thread:$0]  %s912, 1024, %s2, [#allocation4]
    $region21: #{tpu_custom_call.1} parent=1 // pred_fallthru
      _
    // Predicated region
    $region22: #{tpu_custom_call.1} parent=1 // pred_check
      _
    $region23: #{tpu_custom_call.1} parent=1 // pred_check_branch
      %916 = sbr.rel (0) target = $region25
    $region24: #{tpu_custom_call.1} parent=1 // pred_region
      %917 = dma.done [#allocation4], 1024
    $region25: #{tpu_custom_call.1} parent=1 // pred_fallthru
      _
    %918 = vsyncpa [#allocation3], 1
    %919 = vsyncpa [#allocation4], 1
    %920 = vsyncpa [#allocation5], 1

</llo_original>
